<compile_context>
chip_gen: v5e
topology: v5e:2x2
jax: 0.10.0
libtpu: 0.0.40
codegen_flags: <defaults>
</compile_context>

<pallas_src>
import functools

import jax
import jax.numpy as jnp
from jax import lax
from jax.experimental import pallas as pl
from jax.experimental.pallas import tpu as pltpu


# ---------------------------------------------------------------------------
# Fused kernel: conv (per row-tap matmuls) + bias + ELU + per-tile BN partials
# ---------------------------------------------------------------------------
def _conv_elu_stats_kernel(x_ref, w_ref, b_ref, a_ref, stat_ref, acc_ref, *,
                           fs, tm, w_img, w_out, m_valid, w_resident):
    i = pl.program_id(0)                      # output-row tile ("parallel")
    k = pl.program_id(1)                      # kernel row tap fi ("arbitrary")

    @pl.when(k == 0)
    def _init():
        acc_ref[...] = jnp.zeros_like(acc_ref)

    # fs width taps for this row tap: fj is a static offset into the
    # (tm + halo)-row input tile; each tap is one C_in-deep MXU dot.
    acc = acc_ref[...]
    for fj in range(fs):
        xs = x_ref[0, 0, pl.ds(fj, tm), :]                       # [tm, C_in]
        wt = w_ref[k, fj] if w_resident else w_ref[0, fj]        # [C_in, C_pad]
        acc = acc + jnp.dot(xs, wt, preferred_element_type=jnp.float32)
    acc_ref[...] = acc

    @pl.when(k == pl.num_programs(1) - 1)
    def _finalize():
        y = acc_ref[...] + b_ref[...]
        # ELU(alpha=1): the EUP exp only sees the clamped negative branch.
        a = jnp.where(y > 0, y, jnp.exp(jnp.minimum(y, 0.0)) - 1.0)
        a_ref[...] = a.astype(a_ref.dtype)

        # Per-tile BatchNorm partial sums.  Rows are (n, ho, w) with w in
        # [0, W); only w < Wo and global row < N*Ho*W are real conv outputs, so
        # every tile masks its invalid rows (full-W row layout => the mask
        # cannot be gated to the last tile only).
        rid = lax.broadcasted_iota(jnp.int32, (tm, 1), 0) + i * tm
        valid = (rid < m_valid) & ((rid % w_img) < w_out)
        a_m = jnp.where(valid, a, 0.0)
        stat_ref[0, 0:1, :] = jnp.sum(a_m, axis=0, keepdims=True)
        stat_ref[0, 1:2, :] = jnp.sum(a_m * a_m, axis=0, keepdims=True)


def conv_bn_forward(x_nchw, weight, bias, gamma, beta, fs,
                    stride_h=2, stride_w=1, *, tm=1024, eps=1e-5,
                    matmul_dtype=None, act_dtype=jnp.float32):
    """x_nchw: [N, C_in, H, W]; weight: [C_out, C_in, fs, fs] (PyTorch layouts)."""
    assert stride_w == 1, "kernel layout assumes stride_w == 1 (module uses stride=(2, 1))"
    N, C_in, H, W = x_nchw.shape
    C_out = weight.shape[0]
    Ho = (H - fs) // stride_h + 1
    Wo = (W - fs) // stride_w + 1
    Mp = N * Ho * W                 # rows carry the full W; w >= Wo is masked

    LANE = 128
    C_pad = -(-C_out // LANE) * LANE  # TODO(synk): pack Wo into lanes when C_out << 128
    C_in_pad = -(-C_in // 8) * 8
    mat_dt = jnp.float32 if matmul_dtype is None else matmul_dtype

    # Row tile: multiple of 32 sublanes (covers f32/bf16/int8 tiling); ensure
    # >= 2 tiles so both v7x TensorCores get work on the "parallel" axis.
    tm_eff = max(32, (int(tm) // 32) * 32)
    while tm_eff > 32 and -(-Mp // tm_eff) < 2:
        tm_eff = max(32, ((tm_eff // 2) // 32) * 32)
    tm = tm_eff
    G = -(-Mp // tm)
    Mp_pad = G * tm
    halo = max(8, -(-(fs - 1) // 8) * 8)  # extra rows so the fj slices stay in bounds

    # ---- stage tap-strided, halo-extended row tiles (single XLA gather) ----
    # x_tiles[fi, g, r, ci] = x[n, ci, stride_h*ho + fi, w] with the global row
    # m = g*tm + r decoded as (n, ho, w) over the (N, Ho, W) output-row space.
    # TODO(synk): replace the gather with in-kernel DMA from an NHWC HBM ref
    # (memory_space=pl.ANY) to drop the remaining ~fs/stride_h x staging copy.
    r = jnp.arange(tm + halo, dtype=jnp.int32)
    g = jnp.arange(G, dtype=jnp.int32)
    m = jnp.minimum(g[:, None] * tm + r[None, :], Mp - 1)          # [G, tm+halo]
    n_i = m // (Ho * W)
    ho_i = (m % (Ho * W)) // W
    w_i = m % W
    fi = jnp.arange(fs, dtype=jnp.int32)
    src = (n_i[None] * H + stride_h * ho_i[None] + fi[:, None, None]) * W + w_i[None]

    x_rows = jnp.transpose(x_nchw, (0, 2, 3, 1)).reshape(N * H * W, C_in).astype(mat_dt)
    if C_in_pad != C_in:
        x_rows = jnp.pad(x_rows, ((0, 0), (0, C_in_pad - C_in)))
    x_tiles = jnp.take(x_rows, src, axis=0)                        # [fs, G, tm+halo, C_in_pad]

    w_taps = jnp.zeros((fs, fs, C_in_pad, C_pad), mat_dt)
    w_taps = w_taps.at[:, :, :C_in, :C_out].set(
        jnp.transpose(weight, (2, 3, 1, 0)).astype(mat_dt))        # [fi, fj, ci, co]
    b_p = jnp.zeros((1, C_pad), jnp.float32).at[0, :C_out].set(bias.astype(jnp.float32))

    # Keep all fs*fs weight taps VMEM-resident when small; stream per row tap
    # along the K grid axis when large so VMEM stays bounded (v7x 64 MiB).
    itm = jnp.dtype(mat_dt).itemsize
    ita = jnp.dtype(act_dtype).itemsize
    w_resident = fs * fs * C_in_pad * C_pad * itm <= 4 * 1024 * 1024
    if w_resident:
        w_spec = pl.BlockSpec((fs, fs, C_in_pad, C_pad), lambda i, k: (0, 0, 0, 0))
    else:
        w_spec = pl.BlockSpec((1, fs, C_in_pad, C_pad), lambda i, k: (k, 0, 0, 0))

    # Generation-aware VMEM cap: ~70% of physical (v5e/v6e 128 MiB, v7x 64 MiB).
    need = (2 * (tm + halo) * C_in_pad * itm
            + 2 * (fs if w_resident else 1) * fs * C_in_pad * C_pad * itm
            + 2 * tm * C_pad * ita + tm * C_pad * 4 + 8 * C_pad * 4)
    try:
        vmem_cap = int(pltpu.get_tpu_info().vmem_capacity_bytes)
    except Exception:
        vmem_cap = 64 * 1024 * 1024
    vmem_limit = int(min(max(4 * need, 32 * 1024 * 1024), int(0.70 * vmem_cap)))
    vmem_limit = int(max(vmem_limit, 2 * need))

    kern = functools.partial(_conv_elu_stats_kernel, fs=fs, tm=tm, w_img=W,
                             w_out=Wo, m_valid=Mp, w_resident=w_resident)
    a_full, stats = pl.pallas_call(
        kern,
        out_shape=(jax.ShapeDtypeStruct((Mp_pad, C_pad), act_dtype),   # activations
                   jax.ShapeDtypeStruct((G, 2, C_pad), jnp.float32)),  # per-tile sum/sumsq
        grid=(G, fs),
        in_specs=[
            pl.BlockSpec((1, 1, tm + halo, C_in_pad), lambda i, k: (k, i, 0, 0)),
            w_spec,
            pl.BlockSpec((1, C_pad), lambda i, k: (0, 0)),             # resident bias
        ],
        out_specs=(
            pl.BlockSpec((tm, C_pad), lambda i, k: (i, 0)),
            pl.BlockSpec((1, 2, C_pad), lambda i, k: (i, 0, 0)),
        ),
        scratch_shapes=[pltpu.VMEM((tm, C_pad), jnp.float32)],
        compiler_params=pltpu.CompilerParams(
            dimension_semantics=("parallel", "arbitrary"),
            vmem_limit_bytes=vmem_limit),
    )(x_tiles, w_taps, b_p)

    # ---- global BN statistics (tiny [G, 2, C] reduction) + folded affine ----
    # TODO(synk): for very large M, accumulate centered/shifted sums instead of
    # E[x^2] - E[x]^2 to avoid cancellation.
    cnt = jnp.float32(N * Ho * Wo)
    mean = jnp.sum(stats[:, 0, :C_out], axis=0) / cnt
    var = jnp.maximum(jnp.sum(stats[:, 1, :C_out], axis=0) / cnt - mean * mean, 0.0)
    inv = lax.rsqrt(var + eps)
    scale = gamma.astype(jnp.float32) * inv
    shift = beta.astype(jnp.float32) - mean * scale

    # BN apply + crop + NCHW transpose fuse into one XLA pass over the output
    # (replaces the former pass-2 pallas_call read/write round trip).
    a = a_full[:Mp, :C_out].astype(jnp.float32).reshape(N, Ho, W, C_out)[:, :, :Wo, :]
    return jnp.transpose(a * scale + shift, (0, 3, 1, 2))


def _reference(x_nchw, weight, bias, gamma, beta, fs, eps=1e-5):
    """Pure-JAX reference (training-mode BatchNorm2d semantics)."""
    y = lax.conv_general_dilated(
        x_nchw, weight, window_strides=(2, 1), padding="VALID",
        dimension_numbers=("NCHW", "OIHW", "NCHW"))
    y = y + bias.reshape(1, -1, 1, 1)
    a = jnp.where(y > 0, y, jnp.exp(jnp.minimum(y, 0.0)) - 1.0)
    mean = jnp.mean(a, axis=(0, 2, 3), keepdims=True)
    var = jnp.mean((a - mean) ** 2, axis=(0, 2, 3), keepdims=True)
    norm = (a - mean) * lax.rsqrt(var + eps)
    return norm * gamma.reshape(1, -1, 1, 1) + beta.reshape(1, -1, 1, 1)


if __name__ == "__main__":
    # conv_bn(i_f=4, o_f=8, fs=3), input x: [2, 4, 16, 16]
    i_f, o_f, fs = 4, 8, 3
    N, H, W = 2, 16, 16

    key = jax.random.PRNGKey(0)
    kx, kw, kb, kg, kbe = jax.random.split(key, 5)

    x = jax.random.normal(kx, (N, i_f, H, W), dtype=jnp.float32)
    weight = jax.random.normal(kw, (o_f, i_f, fs, fs), dtype=jnp.float32) * 0.1
    bias = jax.random.normal(kb, (o_f,), dtype=jnp.float32) * 0.1
    gamma = 1.0 + 0.1 * jax.random.normal(kg, (o_f,), dtype=jnp.float32)
    beta = 0.1 * jax.random.normal(kbe, (o_f,), dtype=jnp.float32)

    # tm=64 at toy size so the multi-tile grid, K-axis accumulator and
    # cross-tile BN-stat reduction are all exercised (default tm=1024).
    out = conv_bn_forward(x, weight, bias, gamma, beta, fs, tm=64)
    out = jax.block_until_ready(out)

    ref = _reference(x, weight, bias, gamma, beta, fs)
    assert out.shape == ref.shape == (N, o_f, (H - fs) // 2 + 1, W - fs + 1)
    assert jnp.allclose(out, ref, atol=1e-4, rtol=1e-4), "mismatch vs reference"

    # Reduced-precision streaming path (bf16 matmul inputs + bf16 activation
    # intermediate, f32 accumulation/stats): loose tolerance per perf review.
    out_bf = conv_bn_forward(x, weight, bias, gamma, beta, fs, tm=64,
                             matmul_dtype=jnp.bfloat16, act_dtype=jnp.bfloat16)
    out_bf = jax.block_until_ready(out_bf)
    assert out_bf.shape == ref.shape
    assert float(jnp.max(jnp.abs(out_bf.astype(jnp.float32) - ref))) < 0.5

    print("KERNEL_OK")
</pallas_src>

<mosaic_0001>
module attributes {stable_mosaic.version = 11 : i64} {
  func.func @_conv_elu_stats_kernel(%arg0: i32, %arg1: i32, %arg2: memref<1x1x72x8xf32, #tpu.memory_space<vmem>>, %arg3: memref<3x3x8x128xf32, #tpu.memory_space<vmem>>, %arg4: memref<1x128xf32, #tpu.memory_space<vmem>>, %arg5: memref<64x128xf32, #tpu.memory_space<vmem>>, %arg6: memref<1x2x128xf32, #tpu.memory_space<vmem>>, %arg7: memref<64x128xf32, #tpu.memory_space<vmem>>) attributes {dimension_semantics = [#tpu.dimension_semantics<parallel>, #tpu.dimension_semantics<arbitrary>], iteration_bounds = array<i64: 4, 3>, scalar_prefetch = 0 : i64, scratch_operands = 1 : i64, tpu.core_type = #tpu.core_type<tc>, window_params = [{transform_indices = @transform_0, window_bounds = array<i64: 1, 1, 72, 8>}, {pipeline_mode = #tpu.pipeline_mode<synchronous>, transform_indices = @transform_1, window_bounds = array<i64: 3, 3, 8, 128>}, {pipeline_mode = #tpu.pipeline_mode<synchronous>, transform_indices = @transform_2, window_bounds = array<i64: 1, 128>}, {transform_indices = @transform_3, window_bounds = array<i64: 64, 128>}, {transform_indices = @transform_4, window_bounds = array<i64: 1, 2, 128>}]} {
    %c0_i32 = arith.constant 0 : i32
    %0 = arith.cmpi eq, %arg1, %c0_i32 : i32
    %1 = arith.extui %0 : i1 to i32
    %c0_i32_0 = arith.constant 0 : i32
    %2 = arith.cmpi ne, %1, %c0_i32_0 : i32
    scf.if %2 {
      %cst_26 = arith.constant 0.000000e+00 : f32
      %29 = vector.broadcast %cst_26 : f32 to vector<64x128xf32>
      %c0_27 = arith.constant 0 : index
      %c0_28 = arith.constant 0 : index
      %30 = vector.load %arg7[%c0_27, %c0_28] : memref<64x128xf32, #tpu.memory_space<vmem>>, vector<64x128xf32>
      tpu.vector_store %arg7[%c0_27, %c0_28], %29 {strides = array<i32>} : memref<64x128xf32, #tpu.memory_space<vmem>>, vector<64x128xf32>,
    } else {
    }
    %c0 = arith.constant 0 : index
    %c0_1 = arith.constant 0 : index
    %3 = vector.load %arg7[%c0, %c0_1] : memref<64x128xf32, #tpu.memory_space<vmem>>, vector<64x128xf32>
    %c0_2 = arith.constant 0 : index
    %c0_3 = arith.constant 0 : index
    %c0_4 = arith.constant 0 : index
    %c0_5 = arith.constant 0 : index
    %4 = vector.load %arg2[%c0_2, %c0_3, %c0_4, %c0_5] : memref<1x1x72x8xf32, #tpu.memory_space<vmem>>, vector<1x1x64x8xf32>
    %5 = vector.shape_cast %4 : vector<1x1x64x8xf32> to vector<64x8xf32>
    %6 = arith.index_cast %arg1 : i32 to index
    %c0_6 = arith.constant 0 : index
    %c0_7 = arith.constant 0 : index
    %c0_8 = arith.constant 0 : index
    %7 = vector.load %arg3[%6, %c0_6, %c0_7, %c0_8] : memref<3x3x8x128xf32, #tpu.memory_space<vmem>>, vector<1x1x8x128xf32>
    %8 = vector.shape_cast %7 : vector<1x1x8x128xf32> to vector<8x128xf32>
    %cst = arith.constant dense<0.000000e+00> : vector<64x128xf32>
    %9 = tpu.matmul %5, %8, %cst {dimension_numbers = #tpu.dot_dimension_numbers<[1], [0], [0], [1], [0, 0, 1, 1], [], []>} : vector<64x8xf32>, vector<8x128xf32>, vector<64x128xf32> -> vector<64x128xf32>
    %10 = arith.addf %3, %9 : vector<64x128xf32>
    %c0_9 = arith.constant 0 : index
    %c0_10 = arith.constant 0 : index
    %c1 = arith.constant 1 : index
    %c0_11 = arith.constant 0 : index
    %11 = vector.load %arg2[%c0_9, %c0_10, %c1, %c0_11] : memref<1x1x72x8xf32, #tpu.memory_space<vmem>>, vector<1x1x64x8xf32>
    %12 = vector.shape_cast %11 : vector<1x1x64x8xf32> to vector<64x8xf32>
    %13 = arith.index_cast %arg1 : i32 to index
    %c1_12 = arith.constant 1 : index
    %c0_13 = arith.constant 0 : index
    %c0_14 = arith.constant 0 : index
    %14 = vector.load %arg3[%13, %c1_12, %c0_13, %c0_14] : memref<3x3x8x128xf32, #tpu.memory_space<vmem>>, vector<1x1x8x128xf32>
    %15 = vector.shape_cast %14 : vector<1x1x8x128xf32> to vector<8x128xf32>
    %cst_15 = arith.constant dense<0.000000e+00> : vector<64x128xf32>
    %16 = tpu.matmul %12, %15, %cst_15 {dimension_numbers = #tpu.dot_dimension_numbers<[1], [0], [0], [1], [0, 0, 1, 1], [], []>} : vector<64x8xf32>, vector<8x128xf32>, vector<64x128xf32> -> vector<64x128xf32>
    %17 = arith.addf %10, %16 : vector<64x128xf32>
    %c0_16 = arith.constant 0 : index
    %c0_17 = arith.constant 0 : index
    %c2 = arith.constant 2 : index
    %c0_18 = arith.constant 0 : index
    %18 = vector.load %arg2[%c0_16, %c0_17, %c2, %c0_18] : memref<1x1x72x8xf32, #tpu.memory_space<vmem>>, vector<1x1x64x8xf32>
    %19 = vector.shape_cast %18 : vector<1x1x64x8xf32> to vector<64x8xf32>
    %20 = arith.index_cast %arg1 : i32 to index
    %c2_19 = arith.constant 2 : index
    %c0_20 = arith.constant 0 : index
    %c0_21 = arith.constant 0 : index
    %21 = vector.load %arg3[%20, %c2_19, %c0_20, %c0_21] : memref<3x3x8x128xf32, #tpu.memory_space<vmem>>, vector<1x1x8x128xf32>
    %22 = vector.shape_cast %21 : vector<1x1x8x128xf32> to vector<8x128xf32>
    %cst_22 = arith.constant dense<0.000000e+00> : vector<64x128xf32>
    %23 = tpu.matmul %19, %22, %cst_22 {dimension_numbers = #tpu.dot_dimension_numbers<[1], [0], [0], [1], [0, 0, 1, 1], [], []>} : vector<64x8xf32>, vector<8x128xf32>, vector<64x128xf32> -> vector<64x128xf32>
    %24 = arith.addf %17, %23 : vector<64x128xf32>
    %c0_23 = arith.constant 0 : index
    %c0_24 = arith.constant 0 : index
    %25 = vector.load %arg7[%c0_23, %c0_24] : memref<64x128xf32, #tpu.memory_space<vmem>>, vector<64x128xf32>
    tpu.vector_store %arg7[%c0_23, %c0_24], %24 {strides = array<i32>} : memref<64x128xf32, #tpu.memory_space<vmem>>, vector<64x128xf32>,
    %c2_i32 = arith.constant 2 : i32
    %26 = arith.cmpi eq, %arg1, %c2_i32 : i32
    %27 = arith.extui %26 : i1 to i32
    %c0_i32_25 = arith.constant 0 : i32
    %28 = arith.cmpi ne, %27, %c0_i32_25 : i32
    scf.if %28 {
      %c0_26 = arith.constant 0 : index
      %c0_27 = arith.constant 0 : index
      %29 = vector.load %arg7[%c0_26, %c0_27] : memref<64x128xf32, #tpu.memory_space<vmem>>, vector<64x128xf32>
      %c0_28 = arith.constant 0 : index
      %c0_29 = arith.constant 0 : index
      %30 = vector.load %arg4[%c0_28, %c0_29] : memref<1x128xf32, #tpu.memory_space<vmem>>, vector<1x128xf32>
      %31 = vector.broadcast %30 : vector<1x128xf32> to vector<64x128xf32>
      %32 = arith.addf %29, %31 : vector<64x128xf32>
      %cst_30 = arith.constant 0.000000e+00 : f32
      %33 = vector.broadcast %cst_30 : f32 to vector<64x128xf32>
      %34 = arith.cmpf ogt, %32, %33 : vector<64x128xf32>
      %cst_31 = arith.constant 0.000000e+00 : f32
      %35 = vector.broadcast %cst_31 : f32 to vector<64x128xf32>
      %36 = arith.minimumf %32, %35 : vector<64x128xf32>
      %37 = math.exp %36 : vector<64x128xf32>
      %cst_32 = arith.constant 1.000000e+00 : f32
      %38 = vector.broadcast %cst_32 : f32 to vector<64x128xf32>
      %39 = arith.subf %37, %38 : vector<64x128xf32>
      %40 = arith.select %34, %32, %39 : vector<64x128xi1>, vector<64x128xf32>
      %c0_33 = arith.constant 0 : index
      %c0_34 = arith.constant 0 : index
      %41 = vector.load %arg5[%c0_33, %c0_34] : memref<64x128xf32, #tpu.memory_space<vmem>>, vector<64x128xf32>
      tpu.vector_store %arg5[%c0_33, %c0_34], %40 {strides = array<i32>} : memref<64x128xf32, #tpu.memory_space<vmem>>, vector<64x128xf32>,
      %42 = tpu.iota {dimensions = array<i32: 0>} : vector<64x1xi32>
      %c64_i32 = arith.constant 64 : i32
      %43 = arith.muli %arg0, %c64_i32 : i32
      %44 = vector.broadcast %43 : i32 to vector<64x1xi32>
      %45 = arith.addi %42, %44 : vector<64x1xi32>
      %c224_i32 = arith.constant 224 : i32
      %46 = vector.broadcast %c224_i32 : i32 to vector<64x1xi32>
      %47 = arith.cmpi slt, %45, %46 : vector<64x1xi32>
      %c16_i32 = arith.constant 16 : i32
      %c0_i32_35 = arith.constant 0 : i32
      %48 = arith.cmpi eq, %c16_i32, %c0_i32_35 : i32
      %c1_i32 = arith.constant 1 : i32
      %49 = arith.select %48, %c1_i32, %c16_i32 : i32
      %50 = vector.broadcast %49 : i32 to vector<64x1xi32>
      %51 = arith.remsi %45, %50 : vector<64x1xi32>
      %c0_i32_36 = arith.constant 0 : i32
      %52 = vector.broadcast %c0_i32_36 : i32 to vector<64x1xi32>
      %53 = arith.cmpi ne, %51, %52 : vector<64x1xi32>
      %c0_i32_37 = arith.constant 0 : i32
      %54 = vector.broadcast %c0_i32_37 : i32 to vector<64x1xi32>
      %55 = arith.cmpi slt, %51, %54 : vector<64x1xi32>
      %c0_i32_38 = arith.constant 0 : i32
      %56 = arith.cmpi slt, %49, %c0_i32_38 : i32
      %57 = vector.broadcast %56 : i1 to vector<64x1xi1>
      %58 = vector.broadcast %57 : vector<64x1xi1> to vector<64x1xi1>
      %59 = arith.xori %55, %58 : vector<64x1xi1>
      %60 = arith.andi %59, %53 : vector<64x1xi1>
      %61 = vector.broadcast %49 : i32 to vector<64x1xi32>
      %62 = arith.addi %51, %61 : vector<64x1xi32>
      %63 = arith.select %60, %62, %51 : vector<64x1xi1>, vector<64x1xi32>
      %c14_i32 = arith.constant 14 : i32
      %64 = vector.broadcast %c14_i32 : i32 to vector<64x1xi32>
      %65 = arith.cmpi slt, %63, %64 : vector<64x1xi32>
      %66 = arith.andi %47, %65 : vector<64x1xi1>
      %cst_39 = arith.constant 0.000000e+00 : f32
      %67 = vector.shape_cast %66 : vector<64x1xi1> to vector<64x1xi1>
      %68 = vector.broadcast %67 : vector<64x1xi1> to vector<64x128xi1>
      %69 = vector.broadcast %cst_39 : f32 to vector<64x128xf32>
      %70 = arith.select %68, %40, %69 : vector<64x128xi1>, vector<64x128xf32>
      %cst_40 = arith.constant dense<0.000000e+00> : vector<128xf32>
      %71 = vector.multi_reduction <add>, %70, %cst_40 [0] : vector<64x128xf32> to vector<128xf32>
      %72 = vector.shape_cast %71 : vector<128xf32> to vector<1x128xf32>
      %c0_41 = arith.constant 0 : index
      %c0_42 = arith.constant 0 : index
      %c0_43 = arith.constant 0 : index
      %73 = vector.load %arg6[%c0_41, %c0_42, %c0_43] : memref<1x2x128xf32, #tpu.memory_space<vmem>>, vector<1x1x128xf32>
      %74 = vector.shape_cast %73 : vector<1x1x128xf32> to vector<1x128xf32>
      %75 = vector.shape_cast %72 : vector<1x128xf32> to vector<1x1x128xf32>
      tpu.vector_store %arg6[%c0_41, %c0_42, %c0_43], %75 {strides = array<i32>} : memref<1x2x128xf32, #tpu.memory_space<vmem>>, vector<1x1x128xf32>,
      %76 = arith.mulf %70, %70 : vector<64x128xf32>
      %cst_44 = arith.constant dense<0.000000e+00> : vector<128xf32>
      %77 = vector.multi_reduction <add>, %76, %cst_44 [0] : vector<64x128xf32> to vector<128xf32>
      %78 = vector.shape_cast %77 : vector<128xf32> to vector<1x128xf32>
      %c0_45 = arith.constant 0 : index
      %c1_46 = arith.constant 1 : index
      %c0_47 = arith.constant 0 : index
      %79 = vector.load %arg6[%c0_45, %c1_46, %c0_47] : memref<1x2x128xf32, #tpu.memory_space<vmem>>, vector<1x1x128xf32>
      %80 = vector.shape_cast %79 : vector<1x1x128xf32> to vector<1x128xf32>
      %81 = vector.shape_cast %78 : vector<1x128xf32> to vector<1x1x128xf32>
      tpu.vector_store %arg6[%c0_45, %c1_46, %c0_47], %81 {strides = array<i32>} : memref<1x2x128xf32, #tpu.memory_space<vmem>>, vector<1x1x128xf32>,
    } else {
    }
    return
  }
  func.func @transform_0(%arg0: i32, %arg1: i32) -> (i32, i32, i32, i32) {
    %c0_i32 = arith.constant 0 : i32
    %c0_i32_0 = arith.constant 0 : i32
    %c0_i32_1 = arith.constant 0 : i32
    return %arg1, %arg0, %c0_i32, %c0_i32_0 : i32, i32, i32, i32
  }
  func.func @transform_1(%arg0: i32, %arg1: i32) -> (i32, i32, i32, i32) {
    %c0_i32 = arith.constant 0 : i32
    %c0_i32_0 = arith.constant 0 : i32
    %c0_i32_1 = arith.constant 0 : i32
    %c0_i32_2 = arith.constant 0 : i32
    %c0_i32_3 = arith.constant 0 : i32
    return %c0_i32, %c0_i32_0, %c0_i32_1, %c0_i32_2 : i32, i32, i32, i32
  }
  func.func @transform_2(%arg0: i32, %arg1: i32) -> (i32, i32) {
    %c0_i32 = arith.constant 0 : i32
    %c0_i32_0 = arith.constant 0 : i32
    %c0_i32_1 = arith.constant 0 : i32
    return %c0_i32, %c0_i32_0 : i32, i32
  }
  func.func @transform_3(%arg0: i32, %arg1: i32) -> (i32, i32) {
    %c0_i32 = arith.constant 0 : i32
    %c0_i32_0 = arith.constant 0 : i32
    return %arg0, %c0_i32 : i32, i32
  }
  func.func @transform_4(%arg0: i32, %arg1: i32) -> (i32, i32, i32) {
    %c0_i32 = arith.constant 0 : i32
    %c0_i32_0 = arith.constant 0 : i32
    %c0_i32_1 = arith.constant 0 : i32
    return %arg0, %c0_i32, %c0_i32_0 : i32, i32, i32
  }
}

</mosaic_0001>

<llo_original>
// kernel: tpu_custom_call.1
$region0: #{tpu_custom_call.1}
  #allocation0 [shape = 'u32[]', space=smem, size = 0x4, offset = 0x4, fixed_abs, tag = 'smem constant byte address 0x4 - core index']
  #allocation1 [shape = 'u32[72,128]{1,0:T(1,128)}', space=vmem, size = 0x9000, scoped, tag = 'internal scratch']
  #allocation2 [shape = 'f32[64,128]{1,0:T(8,128)}', space=vmem, size = 0x8000, scoped, tag = 'scratch operand']
  %s0 = inlined_call_operand.vmem [shape: f32[3,4,72,8], index: 0, kind: input, shape index: {}]
  %s1 = inlined_call_operand.vmem [shape: f32[3,3,8,128], index: 1, kind: input, shape index: {}]
  %s2 = inlined_call_operand.vmem [shape: f32[1,128], index: 2, kind: input, shape index: {}]
  %s3 = inlined_call_operand.hbm [shape: f32[256,128], index: 3, kind: output, shape index: {0}]
  %s4 = inlined_call_operand.hbm [shape: f32[4,2,128], index: 4, kind: output, shape index: {1}]
  %5 = xla_tuple %s3, %s4
  %s6 = sld [smem:[#allocation0]]
  $region61: #{tpu_custom_call.1} parent=0
    _
  %s8 = ssub.s32 1, %s6
  %s9 = scalar_select 0, %s8, %s6
  $region1: #{tpu_custom_call.1} parent=0
    #allocation3 [shape = 'u8[65536]{0}', space=vmem, size = 0x10000, scoped, tag = 'output window, operand 0']
    #allocation4 [shape = 's32[2]{0}', space=sflag, size = 0x8, scoped, tag = 'scoped memory for tpu_custom_call.1']
    #allocation5 [shape = 'u8[2048]{0}', space=vmem, size = 0x800, scoped, tag = 'output window, operand 1']
    #allocation6 [shape = 's32[2]{0}', space=sflag, size = 0x8, scoped, tag = 'scoped memory for tpu_custom_call.1']
    %10 = vsyncpa [#allocation4], 0
    %s11 = scalar_lea.sflag [#allocation4], 1
    %12 = vsyncpa %s11, 0
    %13 = vsyncpa [#allocation6], 0
    %s14 = scalar_lea.sflag [#allocation6], 1
    %15 = vsyncpa %s14, 0
    loop: start=0, step=1, limit=14
    $region2: #{tpu_custom_call.1} parent=1 // loop_pre_header
      _
    $region3: #{tpu_custom_call.1} parent=1 // loop_header
      %s17 = sphi 0, %s21
      %p18 = scmp.ge.s32.totalorder %s17, 14
      %s24 = sphi 0, %s36
      %s25 = sphi 0, %s32
      %s26 = sphi 0, %s24
      %s27 = sphi 0, %s25
      %s28 = sphi 0, %s26
      %s29 = sphi 0, %s27
      %s41 = sphi 0, %s43
      %s44 = sphi 0, %s41
      %s45 = sphi 0, %s44
      %s61 = sphi 0, %s45
      %s65 = sphi 0, %s65
      %s67 = sphi 0, %s65
      %s68 = sphi 0, %s67
      %s82 = sphi 0, %s68
      %s86 = sphi 0, %s86
      %s88 = sphi 0, %s86
      %s89 = sphi 0, %s88
      %s103 = sphi 0, %s89
      %s109 = sphi 0, %s111
      %s112 = sphi 0, %s109
      %s113 = sphi 0, %s112
      %s129 = sphi 0, %s113
      %s135 = sphi 0, %s137
      %s138 = sphi 0, %s135
      %s139 = sphi 0, %s138
      %s155 = sphi 0, %s139
    $region4: #{tpu_custom_call.1} parent=1 // loop_header_branch
      %20 = sbr.rel (%p18) target = $region8
    $region5: #{tpu_custom_call.1} parent=1 // loop_body
      %s22 = ssub.s32 %s17, 1
      %s23 = ssub.s32 %s17, 2
      %s30 = sadd.s32 1, %s25
      %p31 = scmp.ge.s32.totalorder %s30, 3
      %s32 = scalar_select %p31, 0, %s30
      %s33 = sadd.s32 1, %s24
      %s34 = scalar_select %p31, %s33, %s24
      %p35 = scmp.ge.s32.totalorder %s34, 4
      %s36 = scalar_select %p35, 0, %s34
      %s37 = ssub.s32 %s25, %s32
      %s38 = ssub.s32 %s24, %s36
      %s39 = sor.u32 %s37, %s38
      %p40 = scmp.eq.s32.totalorder %s39, 0
      %s42 = sadd.s32 %s41, 1
      %s43 = scalar_select %p40, %s41, %s42
      %p46 = pneg %p40
      %p47 = scmp.eq.s32.totalorder %s17, 11
      %p48 = por %p46, %p47
      %p49 = scmp.ne.s32.totalorder %s41, %s44
      %p50 = scmp.eq.s32.totalorder %s17, 0
      %p51 = por %p49, %p50
      %p52 = scmp.ne.s32.totalorder %s41, %s44
      %p53 = scmp.eq.s32.totalorder %s22, 11
      %p54 = por %p52, %p53
      %p55 = scmp.ne.s32.totalorder %s44, %s45
      %p56 = scmp.eq.s32.totalorder %s22, 0
      %p57 = por %p55, %p56
      %p58 = scmp.ne.s32.totalorder %s44, %s45
      %p59 = scmp.eq.s32.totalorder %s23, 11
      %p60 = por %p58, %p59
      %p62 = scmp.ne.s32.totalorder %s45, %s61
      %p63 = scmp.eq.s32.totalorder %s23, 0
      %p64 = por %p62, %p63
      %s66 = sadd.s32 %s65, 1
      %p69 = scmp.eq.s32.totalorder %s17, 11
      %p70 = scmp.ne.s32.totalorder %s65, %s67
      %p71 = scmp.eq.s32.totalorder %s17, 0
      %p72 = por %p70, %p71
      %p73 = scmp.ne.s32.totalorder %s65, %s67
      %p74 = scmp.eq.s32.totalorder %s22, 11
      %p75 = por %p73, %p74
      %p76 = scmp.ne.s32.totalorder %s67, %s68
      %p77 = scmp.eq.s32.totalorder %s22, 0
      %p78 = por %p76, %p77
      %p79 = scmp.ne.s32.totalorder %s67, %s68
      %p80 = scmp.eq.s32.totalorder %s23, 11
      %p81 = por %p79, %p80
      %p83 = scmp.ne.s32.totalorder %s68, %s82
      %p84 = scmp.eq.s32.totalorder %s23, 0
      %p85 = por %p83, %p84
      %s87 = sadd.s32 %s86, 1
      %p90 = scmp.eq.s32.totalorder %s17, 11
      %p91 = scmp.ne.s32.totalorder %s86, %s88
      %p92 = scmp.eq.s32.totalorder %s17, 0
      %p93 = por %p91, %p92
      %p94 = scmp.ne.s32.totalorder %s86, %s88
      %p95 = scmp.eq.s32.totalorder %s22, 11
      %p96 = por %p94, %p95
      %p97 = scmp.ne.s32.totalorder %s88, %s89
      %p98 = scmp.eq.s32.totalorder %s22, 0
      %p99 = por %p97, %p98
      %p100 = scmp.ne.s32.totalorder %s88, %s89
      %p101 = scmp.eq.s32.totalorder %s23, 11
      %p102 = por %p100, %p101
      %p104 = scmp.ne.s32.totalorder %s89, %s103
      %p105 = scmp.eq.s32.totalorder %s23, 0
      %p106 = por %p104, %p105
      %s107 = ssub.s32 %s24, %s36
      %p108 = scmp.eq.s32.totalorder %s107, 0
      %s110 = sadd.s32 %s109, 1
      %s111 = scalar_select %p108, %s109, %s110
      %p114 = pneg %p108
      %p115 = scmp.eq.s32.totalorder %s17, 11
      %p116 = por %p114, %p115
      %p117 = scmp.ne.s32.totalorder %s109, %s112
      %p118 = scmp.eq.s32.totalorder %s17, 0
      %p119 = por %p117, %p118
      %p120 = scmp.ne.s32.totalorder %s109, %s112
      %p121 = scmp.eq.s32.totalorder %s22, 11
      %p122 = por %p120, %p121
      %p123 = scmp.ne.s32.totalorder %s112, %s113
      %p124 = scmp.eq.s32.totalorder %s22, 0
      %p125 = por %p123, %p124
      %p126 = scmp.ne.s32.totalorder %s112, %s113
      %p127 = scmp.eq.s32.totalorder %s23, 11
      %p128 = por %p126, %p127
      %p130 = scmp.ne.s32.totalorder %s113, %s129
      %p131 = scmp.eq.s32.totalorder %s23, 0
      %p132 = por %p130, %p131
      %s133 = ssub.s32 %s24, %s36
      %p134 = scmp.eq.s32.totalorder %s133, 0
      %s136 = sadd.s32 %s135, 1
      %s137 = scalar_select %p134, %s135, %s136
      %p140 = pneg %p134
      %p141 = scmp.eq.s32.totalorder %s17, 11
      %p142 = por %p140, %p141
      %p143 = scmp.ne.s32.totalorder %s135, %s138
      %p144 = scmp.eq.s32.totalorder %s17, 0
      %p145 = por %p143, %p144
      %p146 = scmp.ne.s32.totalorder %s135, %s138
      %p147 = scmp.eq.s32.totalorder %s22, 11
      %p148 = por %p146, %p147
      %p149 = scmp.ne.s32.totalorder %s138, %s139
      %p150 = scmp.eq.s32.totalorder %s22, 0
      %p151 = por %p149, %p150
      %p152 = scmp.ne.s32.totalorder %s138, %s139
      %p153 = scmp.eq.s32.totalorder %s23, 11
      %p154 = por %p152, %p153
      %p156 = scmp.ne.s32.totalorder %s139, %s155
      %p157 = scmp.eq.s32.totalorder %s23, 0
      %p158 = por %p156, %p157
      %p159 = scmp.le.s32.totalorder 1, %s17
      %p160 = scmp.lt.s32.totalorder %s17, 13
      %p161 = pnand %p159, %p160
      %p162 = pneg %p161
      // Predicated region
      $region9: #{tpu_custom_call.1} parent=5 // pred_check
        _
      $region10: #{tpu_custom_call.1} parent=5 // pred_check_branch
        %164 = sbr.rel (%p161) target = $region12
      $region11: #{tpu_custom_call.1} parent=5 // pred_region
        %s165 = ssub.s32 %s17, 1
        // Predicated region
        $region13: #{tpu_custom_call.1} parent=11 // pred_check
          %p166 = pneg %p78
        $region14: #{tpu_custom_call.1} parent=11 // pred_check_branch
          %168 = sbr.rel (%p166) target = $region16
        $region15: #{tpu_custom_call.1} parent=11 // pred_region
          _
        $region16: #{tpu_custom_call.1} parent=11 // pred_fallthru
          _
        // Predicated region
        $region17: #{tpu_custom_call.1} parent=11 // pred_check
          %p169 = pneg %p99
        $region18: #{tpu_custom_call.1} parent=11 // pred_check_branch
          %171 = sbr.rel (%p169) target = $region20
        $region19: #{tpu_custom_call.1} parent=11 // pred_region
          _
        $region20: #{tpu_custom_call.1} parent=11 // pred_fallthru
          _
      $region12: #{tpu_custom_call.1} parent=5 // pred_fallthru
        _
      %p172 = scmp.lt.s32.totalorder %s17, 12
      // Predicated region
      $region21: #{tpu_custom_call.1} parent=5 // pred_check
        %p173 = pneg %p172
      $region22: #{tpu_custom_call.1} parent=5 // pred_check_branch
        %175 = sbr.rel (%p173) target = $region24
      $region23: #{tpu_custom_call.1} parent=5 // pred_region
        // Predicated region
        $region25: #{tpu_custom_call.1} parent=23 // pred_check
          %p176 = pneg %p51
        $region26: #{tpu_custom_call.1} parent=23 // pred_check_branch
          %178 = sbr.rel (%p176) target = $region28
        $region27: #{tpu_custom_call.1} parent=23 // pred_region
          %p179 = scmp.lt.s32.totalorder %s25, 2
          %s180 = scalar_select %p179, %s25, 2
          %p181 = scmp.lt.s32.totalorder %s24, 3
          %s182 = scalar_select %p181, %s24, 3
          %s183 = smul.addr %s182, 9
          %s184 = smul.addr %s180, 36
          %s185 = sadd.s32 %s183, %s184
          %s186 = smul.addr %s185, 8
          %s187 = scalar_lea.vmem %s0, %s186
        $region28: #{tpu_custom_call.1} parent=23 // pred_fallthru
          _
      $region24: #{tpu_custom_call.1} parent=5 // pred_fallthru
        _
      %p188 = scmp.le.s32.totalorder 1, %s17
      %p189 = scmp.lt.s32.totalorder %s17, 13
      %p190 = pnand %p188, %p189
      %p191 = pneg %p190
      // Predicated region
      $region29: #{tpu_custom_call.1} parent=5 // pred_check
        _
      $region30: #{tpu_custom_call.1} parent=5 // pred_check_branch
        %193 = sbr.rel (%p190) target = $region32
      $region31: #{tpu_custom_call.1} parent=5 // pred_region
        %s194 = ssub.s32 %s17, 1
        %p195 = scmp.lt.s32.totalorder %s27, 2
        %s196 = scalar_select %p195, %s27, 2
        %p197 = scmp.lt.s32.totalorder %s26, 3
        %s198 = scalar_select %p197, %s26, 3
        %s199 = smul.addr %s198, 9
        %s200 = smul.addr %s196, 36
        %s201 = sadd.s32 %s199, %s200
        %s202 = smul.addr %s201, 8
        %s203 = scalar_lea.vmem %s0, %s202
        %p204 = pneg %p57
        %p205 = pneg %p54
        %p206 = pneg %p78
        %p207 = pneg %p75
        %p208 = pneg %p99
        %p209 = pneg %p96
        %p210 = pneg %p125
        %p211 = pneg %p122
        %s212 = sand.u32 %s112, 1
        %s213 = scalar_lea.sflag [#allocation4], %s212
        %s214 = sand.u32 %s112, 1
        %s215 = smul.addr %s214, 64
        %s216 = scalar_lea.vmem [#allocation3], %s215
        %p217 = pneg %p151
        %p218 = pneg %p148
        %s219 = sand.u32 %s138, 1
        %s220 = scalar_lea.sflag [#allocation6], %s219
        %s221 = sand.u32 %s138, 1
        %s222 = smul.addr %s221, 2
        %s223 = scalar_lea.vmem [#allocation5], %s222
        %p224 = scmp.lt.s32.totalorder %s27, 2
        %s225 = scalar_select %p224, %s27, 2
        %p226 = scmp.lt.s32.totalorder %s26, 3
        %s227 = scalar_select %p226, %s26, 3
        %s228 = smul.addr %s227, 9
        %s229 = smul.addr %s225, 36
        %s230 = sadd.s32 %s228, %s229
        %s231 = smul.addr %s230, 8
        %s232 = scalar_lea.vmem %s0, %s231
        %s233 = smul.u32 8, %s26
        %p234 = scmp.eq.s32.totalorder %s27, 0
        // Predicated region
        $region33: #{tpu_custom_call.1} parent=31 // pred_check
          %p235 = pneg %p234
        $region34: #{tpu_custom_call.1} parent=31 // pred_check_branch
          %237 = sbr.rel (%p235) target = $region36
        $region35: #{tpu_custom_call.1} parent=31 // pred_region
          %238 = vst [vmem:[#allocation2] sm:$0xff] 0.0
          %239 = vst [vmem:[#allocation2 + $0x8] sm:$0xff] 0.0
          %240 = vst [vmem:[#allocation2 + $0x10] sm:$0xff] 0.0
          %241 = vst [vmem:[#allocation2 + $0x18] sm:$0xff] 0.0
          %242 = vst [vmem:[#allocation2 + $0x20] sm:$0xff] 0.0
          %243 = vst [vmem:[#allocation2 + $0x28] sm:$0xff] 0.0
          %244 = vst [vmem:[#allocation2 + $0x30] sm:$0xff] 0.0
          %245 = vst [vmem:[#allocation2 + $0x38] sm:$0xff] 0.0
        $region36: #{tpu_custom_call.1} parent=31 // pred_fallthru
          _
        %v246 = vld [vmem:[#allocation2] sm:$0xff]
        %v247 = vld [vmem:[#allocation2 + $0x8] sm:$0xff]
        %v248 = vld [vmem:[#allocation2 + $0x10] sm:$0xff]
        %v249 = vld [vmem:[#allocation2 + $0x18] sm:$0xff]
        %v250 = vld [vmem:[#allocation2 + $0x20] sm:$0xff]
        %v251 = vld [vmem:[#allocation2 + $0x28] sm:$0xff]
        %v252 = vld [vmem:[#allocation2 + $0x30] sm:$0xff]
        %v253 = vld [vmem:[#allocation2 + $0x38] sm:$0xff]
        %v254 = vld [vmem:[%s232] sm:$0xff]
        %v255 = vld [vmem:[%s232 + $0x8] sm:$0xff]
        %v256 = vld [vmem:[%s232 + $0x10] sm:$0xff]
        %v257 = vld [vmem:[%s232 + $0x18] sm:$0xff]
        %v258 = vld [vmem:[%s232 + $0x20] sm:$0xff]
        %v259 = vld [vmem:[%s232 + $0x28] sm:$0xff]
        %v260 = vld [vmem:[%s232 + $0x30] sm:$0xff]
        %v261 = vld [vmem:[%s232 + $0x38] sm:$0xff]
        %s262 = smul.u32 %s27, 24
        %s263 = scalar_lea.vmem %s1, %s262
        %v264 = vld [vmem:[%s263] sm:$0xff]
        %vm265 = vcmask 64512
        %v267 = vsel %vm265, %v254, 0
        %v270 = vsel %vm265, %v255, 0
        %v273 = vsel %vm265, %v256, 0
        %v276 = vsel %vm265, %v257, 0
        %v279 = vsel %vm265, %v258, 0
        %v282 = vsel %vm265, %v259, 0
        %v285 = vsel %vm265, %v260, 0
        %v288 = vsel %vm265, %v261, 0
        %290 = vmatpush.msra.mxu0 0.0
        %291 = vmatpush.msra.mxu0 0.0
        %292 = vmatpush.msra.mxu0 0.0
        %293 = vmatpush.msra.mxu0 0.0
        %294 = vmatpush.msra.mxu0 0.0
        %295 = vmatpush.msra.mxu0 0.0
        %296 = vmatpush.msra.mxu0 0.0
        %297 = vmatpush.msra.mxu0 0.0
        %298 = vmatpush.msra.mxu0 0.0
        %299 = vmatpush.msra.mxu0 0.0
        %300 = vmatpush.msra.mxu0 0.0
        %301 = vmatpush.msra.mxu0 0.0
        %302 = vmatpush.msra.mxu0 0.0
        %303 = vmatpush.msra.mxu0 0.0
        %304 = vmatpush.msra.mxu0 0.0
        %305 = vmatpush.msra.mxu0 %v264
        %306 = vmatmul.f32.gmra.mxu0 %v267
        %v307 = vpop.f32.mrf.mxu0
        %v308 = vadd.f32 0.0, %v307
        %309 = vmatmul.f32.gmra.mxu0 %v270
        %v310 = vpop.f32.mrf.mxu0
        %v311 = vadd.f32 0.0, %v310
        %312 = vmatmul.f32.gmra.mxu0 %v273
        %v313 = vpop.f32.mrf.mxu0
        %v314 = vadd.f32 0.0, %v313
        %315 = vmatmul.f32.gmra.mxu0 %v276
        %v316 = vpop.f32.mrf.mxu0
        %v317 = vadd.f32 0.0, %v316
        %318 = vmatmul.f32.gmra.mxu0 %v279
        %v319 = vpop.f32.mrf.mxu0
        %v320 = vadd.f32 0.0, %v319
        %321 = vmatmul.f32.gmra.mxu0 %v282
        %v322 = vpop.f32.mrf.mxu0
        %v323 = vadd.f32 0.0, %v322
        %324 = vmatmul.f32.gmra.mxu0 %v285
        %v325 = vpop.f32.mrf.mxu0
        %v326 = vadd.f32 0.0, %v325
        %327 = vmatmul.f32.gmra.mxu0 %v288
        %v328 = vpop.f32.mrf.mxu0
        %v329 = vadd.f32 0.0, %v328
        %330 = vdwg.mxu0
        %v331 = vadd.f32 %v246, %v308
        %v332 = vadd.f32 %v247, %v311
        %v333 = vadd.f32 %v248, %v314
        %v334 = vadd.f32 %v249, %v317
        %v335 = vadd.f32 %v250, %v320
        %v336 = vadd.f32 %v251, %v323
        %v337 = vadd.f32 %v252, %v326
        %v338 = vadd.f32 %v253, %v329
        %v339 = vld [vmem:[%s232 + $0x1] sm:$0xff]
        %v340 = vld [vmem:[%s232 + $0x9] sm:$0xff]
        %v341 = vld [vmem:[%s232 + $0x11] sm:$0xff]
        %v342 = vld [vmem:[%s232 + $0x19] sm:$0xff]
        %v343 = vld [vmem:[%s232 + $0x21] sm:$0xff]
        %v344 = vld [vmem:[%s232 + $0x29] sm:$0xff]
        %v345 = vld [vmem:[%s232 + $0x31] sm:$0xff]
        %v346 = vld [vmem:[%s232 + $0x39] sm:$0xff]
        %s347 = sadd.s32 8, %s262
        %s348 = scalar_lea.vmem %s1, %s347
        %v349 = vld [vmem:[%s348] sm:$0xff]
        %v351 = vsel %vm265, %v339, 0
        %v354 = vsel %vm265, %v340, 0
        %v357 = vsel %vm265, %v341, 0
        %v360 = vsel %vm265, %v342, 0
        %v363 = vsel %vm265, %v343, 0
        %v366 = vsel %vm265, %v344, 0
        %v369 = vsel %vm265, %v345, 0
        %v372 = vsel %vm265, %v346, 0
        %374 = vmatpush.msra.mxu0 0.0
        %375 = vmatpush.msra.mxu0 0.0
        %376 = vmatpush.msra.mxu0 0.0
        %377 = vmatpush.msra.mxu0 0.0
        %378 = vmatpush.msra.mxu0 0.0
        %379 = vmatpush.msra.mxu0 0.0
        %380 = vmatpush.msra.mxu0 0.0
        %381 = vmatpush.msra.mxu0 0.0
        %382 = vmatpush.msra.mxu0 0.0
        %383 = vmatpush.msra.mxu0 0.0
        %384 = vmatpush.msra.mxu0 0.0
        %385 = vmatpush.msra.mxu0 0.0
        %386 = vmatpush.msra.mxu0 0.0
        %387 = vmatpush.msra.mxu0 0.0
        %388 = vmatpush.msra.mxu0 0.0
        %389 = vmatpush.msra.mxu0 %v349
        %390 = vmatmul.f32.gmra.mxu0 %v351
        %v391 = vpop.f32.mrf.mxu0
        %v392 = vadd.f32 0.0, %v391
        %393 = vmatmul.f32.gmra.mxu0 %v354
        %v394 = vpop.f32.mrf.mxu0
        %v395 = vadd.f32 0.0, %v394
        %396 = vmatmul.f32.gmra.mxu0 %v357
        %v397 = vpop.f32.mrf.mxu0
        %v398 = vadd.f32 0.0, %v397
        %399 = vmatmul.f32.gmra.mxu0 %v360
        %v400 = vpop.f32.mrf.mxu0
        %v401 = vadd.f32 0.0, %v400
        %402 = vmatmul.f32.gmra.mxu0 %v363
        %v403 = vpop.f32.mrf.mxu0
        %v404 = vadd.f32 0.0, %v403
        %405 = vmatmul.f32.gmra.mxu0 %v366
        %v406 = vpop.f32.mrf.mxu0
        %v407 = vadd.f32 0.0, %v406
        %408 = vmatmul.f32.gmra.mxu0 %v369
        %v409 = vpop.f32.mrf.mxu0
        %v410 = vadd.f32 0.0, %v409
        %411 = vmatmul.f32.gmra.mxu0 %v372
        %v412 = vpop.f32.mrf.mxu0
        %v413 = vadd.f32 0.0, %v412
        %414 = vdwg.mxu0
        %v415 = vadd.f32 %v331, %v392
        %v416 = vadd.f32 %v332, %v395
        %v417 = vadd.f32 %v333, %v398
        %v418 = vadd.f32 %v334, %v401
        %v419 = vadd.f32 %v335, %v404
        %v420 = vadd.f32 %v336, %v407
        %v421 = vadd.f32 %v337, %v410
        %v422 = vadd.f32 %v338, %v413
        %v423 = vld [vmem:[%s232 + $0x2] sm:$0xff]
        %v424 = vld [vmem:[%s232 + $0xa] sm:$0xff]
        %v425 = vld [vmem:[%s232 + $0x12] sm:$0xff]
        %v426 = vld [vmem:[%s232 + $0x1a] sm:$0xff]
        %v427 = vld [vmem:[%s232 + $0x22] sm:$0xff]
        %v428 = vld [vmem:[%s232 + $0x2a] sm:$0xff]
        %v429 = vld [vmem:[%s232 + $0x32] sm:$0xff]
        %v430 = vld [vmem:[%s232 + $0x3a] sm:$0xff]
        %s431 = sadd.s32 16, %s262
        %s432 = scalar_lea.vmem %s1, %s431
        %v433 = vld [vmem:[%s432] sm:$0xff]
        %v435 = vsel %vm265, %v423, 0
        %v438 = vsel %vm265, %v424, 0
        %v441 = vsel %vm265, %v425, 0
        %v444 = vsel %vm265, %v426, 0
        %v447 = vsel %vm265, %v427, 0
        %v450 = vsel %vm265, %v428, 0
        %v453 = vsel %vm265, %v429, 0
        %v456 = vsel %vm265, %v430, 0
        %458 = vmatpush.msra.mxu0 0.0
        %459 = vmatpush.msra.mxu0 0.0
        %460 = vmatpush.msra.mxu0 0.0
        %461 = vmatpush.msra.mxu0 0.0
        %462 = vmatpush.msra.mxu0 0.0
        %463 = vmatpush.msra.mxu0 0.0
        %464 = vmatpush.msra.mxu0 0.0
        %465 = vmatpush.msra.mxu0 0.0
        %466 = vmatpush.msra.mxu0 0.0
        %467 = vmatpush.msra.mxu0 0.0
        %468 = vmatpush.msra.mxu0 0.0
        %469 = vmatpush.msra.mxu0 0.0
        %470 = vmatpush.msra.mxu0 0.0
        %471 = vmatpush.msra.mxu0 0.0
        %472 = vmatpush.msra.mxu0 0.0
        %473 = vmatpush.msra.mxu0 %v433
        %474 = vmatmul.f32.gmra.mxu0 %v435
        %v475 = vpop.f32.mrf.mxu0
        %v476 = vadd.f32 0.0, %v475
        %477 = vmatmul.f32.gmra.mxu0 %v438
        %v478 = vpop.f32.mrf.mxu0
        %v479 = vadd.f32 0.0, %v478
        %480 = vmatmul.f32.gmra.mxu0 %v441
        %v481 = vpop.f32.mrf.mxu0
        %v482 = vadd.f32 0.0, %v481
        %483 = vmatmul.f32.gmra.mxu0 %v444
        %v484 = vpop.f32.mrf.mxu0
        %v485 = vadd.f32 0.0, %v484
        %486 = vmatmul.f32.gmra.mxu0 %v447
        %v487 = vpop.f32.mrf.mxu0
        %v488 = vadd.f32 0.0, %v487
        %489 = vmatmul.f32.gmra.mxu0 %v450
        %v490 = vpop.f32.mrf.mxu0
        %v491 = vadd.f32 0.0, %v490
        %492 = vmatmul.f32.gmra.mxu0 %v453
        %v493 = vpop.f32.mrf.mxu0
        %v494 = vadd.f32 0.0, %v493
        %495 = vmatmul.f32.gmra.mxu0 %v456
        %v496 = vpop.f32.mrf.mxu0
        %v497 = vadd.f32 0.0, %v496
        %498 = vdwg.mxu0
        %v499 = vadd.f32 %v415, %v476
        %v500 = vadd.f32 %v416, %v479
        %v501 = vadd.f32 %v417, %v482
        %v502 = vadd.f32 %v418, %v485
        %v503 = vadd.f32 %v419, %v488
        %v504 = vadd.f32 %v420, %v491
        %v505 = vadd.f32 %v421, %v494
        %v506 = vadd.f32 %v422, %v497
        %507 = vst [vmem:[#allocation2] sm:$0xff] %v499
        %508 = vst [vmem:[#allocation2 + $0x8] sm:$0xff] %v500
        %509 = vst [vmem:[#allocation2 + $0x10] sm:$0xff] %v501
        %510 = vst [vmem:[#allocation2 + $0x18] sm:$0xff] %v502
        %511 = vst [vmem:[#allocation2 + $0x20] sm:$0xff] %v503
        %512 = vst [vmem:[#allocation2 + $0x28] sm:$0xff] %v504
        %513 = vst [vmem:[#allocation2 + $0x30] sm:$0xff] %v505
        %514 = vst [vmem:[#allocation2 + $0x38] sm:$0xff] %v506
        %p515 = scmp.eq.s32.totalorder %s27, 2
        // Predicated region
        $region37: #{tpu_custom_call.1} parent=31 // pred_check
          %p516 = pneg %p515
        $region38: #{tpu_custom_call.1} parent=31 // pred_check_branch
          %518 = sbr.rel (%p516) target = $region40
        $region39: #{tpu_custom_call.1} parent=31 // pred_region
          %v519 = vld [vmem:[#allocation2] sm:$0xff]
          %v520 = vld [vmem:[#allocation2 + $0x8] sm:$0xff]
          %v521 = vld [vmem:[#allocation2 + $0x10] sm:$0xff]
          %v522 = vld [vmem:[#allocation2 + $0x18] sm:$0xff]
          %v523 = vld [vmem:[#allocation2 + $0x20] sm:$0xff]
          %v524 = vld [vmem:[#allocation2 + $0x28] sm:$0xff]
          %v525 = vld [vmem:[#allocation2 + $0x30] sm:$0xff]
          %v526 = vld [vmem:[#allocation2 + $0x38] sm:$0xff]
          %v527 = vld [vmem:[%s2] sm:$0x1]
          %v529 = vperm.slane %v527, 0
          %v531 = vadd.f32 %v519, %v529
          %v532 = vadd.f32 %v520, %v529
          %v533 = vadd.f32 %v521, %v529
          %v534 = vadd.f32 %v522, %v529
          %v535 = vadd.f32 %v523, %v529
          %v536 = vadd.f32 %v524, %v529
          %v537 = vadd.f32 %v525, %v529
          %v538 = vadd.f32 %v526, %v529
          %vm539 = vcmp.gt.f32.partialorder %v531, 0.0
          %vm540 = vcmp.gt.f32.partialorder %v532, 0.0
          %vm541 = vcmp.gt.f32.partialorder %v533, 0.0
          %vm542 = vcmp.gt.f32.partialorder %v534, 0.0
          %vm543 = vcmp.gt.f32.partialorder %v535, 0.0
          %vm544 = vcmp.gt.f32.partialorder %v536, 0.0
          %vm545 = vcmp.gt.f32.partialorder %v537, 0.0
          %vm546 = vcmp.gt.f32.partialorder %v538, 0.0
          %v547 = vmin.f32 %v531, 0.0
          %v548 = vmin.f32 %v532, 0.0
          %v549 = vmin.f32 %v533, 0.0
          %v550 = vmin.f32 %v534, 0.0
          %v551 = vmin.f32 %v535, 0.0
          %v552 = vmin.f32 %v536, 0.0
          %v553 = vmin.f32 %v537, 0.0
          %v554 = vmin.f32 %v538, 0.0
          %v555 = vmul.f32 %v547, 1.442695
          %v556 = vpow.pop %v555
          %v557 = vmul.f32 %v548, 1.442695
          %v558 = vpow.pop %v557
          %v559 = vmul.f32 %v549, 1.442695
          %v560 = vpow.pop %v559
          %v561 = vmul.f32 %v550, 1.442695
          %v562 = vpow.pop %v561
          %v563 = vmul.f32 %v551, 1.442695
          %v564 = vpow.pop %v563
          %v565 = vmul.f32 %v552, 1.442695
          %v566 = vpow.pop %v565
          %v567 = vmul.f32 %v553, 1.442695
          %v568 = vpow.pop %v567
          %v569 = vmul.f32 %v554, 1.442695
          %v570 = vpow.pop %v569
          %v571 = vsub.f32 %v556, 1.0
          %v572 = vsub.f32 %v558, 1.0
          %v573 = vsub.f32 %v560, 1.0
          %v574 = vsub.f32 %v562, 1.0
          %v575 = vsub.f32 %v564, 1.0
          %v576 = vsub.f32 %v566, 1.0
          %v577 = vsub.f32 %v568, 1.0
          %v578 = vsub.f32 %v570, 1.0
          %v579 = vsel %vm539, %v531, %v571
          %v580 = vsel %vm540, %v532, %v572
          %v581 = vsel %vm541, %v533, %v573
          %v582 = vsel %vm542, %v534, %v574
          %v583 = vsel %vm543, %v535, %v575
          %v584 = vsel %vm544, %v536, %v576
          %v585 = vsel %vm545, %v537, %v577
          %v586 = vsel %vm546, %v538, %v578
          %587 = vst [vmem:[%s216] sm:$0xff] %v579
          %588 = vst [vmem:[%s216 + $0x8] sm:$0xff] %v580
          %589 = vst [vmem:[%s216 + $0x10] sm:$0xff] %v581
          %590 = vst [vmem:[%s216 + $0x18] sm:$0xff] %v582
          %591 = vst [vmem:[%s216 + $0x20] sm:$0xff] %v583
          %592 = vst [vmem:[%s216 + $0x28] sm:$0xff] %v584
          %593 = vst [vmem:[%s216 + $0x30] sm:$0xff] %v585
          %594 = vst [vmem:[%s216 + $0x38] sm:$0xff] %v586
          %v595 = vlaneseq
          %v596 = vshrl.u32 %v595, 7
          %v597 = vadd.s32 %v596, 8
          %v598 = vadd.s32 %v596, 16
          %v599 = vadd.s32 %v596, 24
          %v600 = vadd.s32 %v596, 32
          %v601 = vadd.s32 %v596, 40
          %v602 = vadd.s32 %v596, 48
          %v603 = vadd.s32 %v596, 56
          %s604 = smul.u32 %s26, 64
          %v605 = vstv %s604
          %v606 = vadd.s32 %v596, %v605
          %v607 = vadd.s32 %v597, %v605
          %v608 = vadd.s32 %v598, %v605
          %v609 = vadd.s32 %v599, %v605
          %v610 = vadd.s32 %v600, %v605
          %v611 = vadd.s32 %v601, %v605
          %v612 = vadd.s32 %v602, %v605
          %v613 = vadd.s32 %v603, %v605
          %vm614 = vcmp.lt.s32.totalorder %v606, 224
          %vm615 = vcmp.lt.s32.totalorder %v607, 224
          %vm616 = vcmp.lt.s32.totalorder %v608, 224
          %vm617 = vcmp.lt.s32.totalorder %v609, 224
          %vm618 = vcmp.lt.s32.totalorder %v610, 224
          %vm619 = vcmp.lt.s32.totalorder %v611, 224
          %vm620 = vcmp.lt.s32.totalorder %v612, 224
          %vm621 = vcmp.lt.s32.totalorder %v613, 224
          %vm622 = vcmp.lt.s32.totalorder %v606, 0
          %v623 = vsub.s32 0, %v606
          %v624 = vsel %vm622, %v623, %v606
          %v625 = vshrl.u32 %v624, 4
          %v626 = vand.u32 %v624, 15
          %v627 = vsub.s32 0, %v626
          %v628 = vsel %vm622, %v627, %v626
          %vm629 = vcmp.lt.s32.totalorder %v607, 0
          %v630 = vsub.s32 0, %v607
          %v631 = vsel %vm629, %v630, %v607
          %v632 = vshrl.u32 %v631, 4
          %v633 = vand.u32 %v631, 15
          %v634 = vsub.s32 0, %v633
          %v635 = vsel %vm629, %v634, %v633
          %vm636 = vcmp.lt.s32.totalorder %v608, 0
          %v637 = vsub.s32 0, %v608
          %v638 = vsel %vm636, %v637, %v608
          %v639 = vshrl.u32 %v638, 4
          %v640 = vand.u32 %v638, 15
          %v641 = vsub.s32 0, %v640
          %v642 = vsel %vm636, %v641, %v640
          %vm643 = vcmp.lt.s32.totalorder %v609, 0
          %v644 = vsub.s32 0, %v609
          %v645 = vsel %vm643, %v644, %v609
          %v646 = vshrl.u32 %v645, 4
          %v647 = vand.u32 %v645, 15
          %v648 = vsub.s32 0, %v647
          %v649 = vsel %vm643, %v648, %v647
          %vm650 = vcmp.lt.s32.totalorder %v610, 0
          %v651 = vsub.s32 0, %v610
          %v652 = vsel %vm650, %v651, %v610
          %v653 = vshrl.u32 %v652, 4
          %v654 = vand.u32 %v652, 15
          %v655 = vsub.s32 0, %v654
          %v656 = vsel %vm650, %v655, %v654
          %vm657 = vcmp.lt.s32.totalorder %v611, 0
          %v658 = vsub.s32 0, %v611
          %v659 = vsel %vm657, %v658, %v611
          %v660 = vshrl.u32 %v659, 4
          %v661 = vand.u32 %v659, 15
          %v662 = vsub.s32 0, %v661
          %v663 = vsel %vm657, %v662, %v661
          %vm664 = vcmp.lt.s32.totalorder %v612, 0
          %v665 = vsub.s32 0, %v612
          %v666 = vsel %vm664, %v665, %v612
          %v667 = vshrl.u32 %v666, 4
          %v668 = vand.u32 %v666, 15
          %v669 = vsub.s32 0, %v668
          %v670 = vsel %vm664, %v669, %v668
          %vm671 = vcmp.lt.s32.totalorder %v613, 0
          %v672 = vsub.s32 0, %v613
          %v673 = vsel %vm671, %v672, %v613
          %v674 = vshrl.u32 %v673, 4
          %v675 = vand.u32 %v673, 15
          %v676 = vsub.s32 0, %v675
          %v677 = vsel %vm671, %v676, %v675
          %vm678 = vcmp.ne.s32.totalorder %v628, 0
          %vm679 = vcmp.ne.s32.totalorder %v635, 0
          %vm680 = vcmp.ne.s32.totalorder %v642, 0
          %vm681 = vcmp.ne.s32.totalorder %v649, 0
          %vm682 = vcmp.ne.s32.totalorder %v656, 0
          %vm683 = vcmp.ne.s32.totalorder %v663, 0
          %vm684 = vcmp.ne.s32.totalorder %v670, 0
          %vm685 = vcmp.ne.s32.totalorder %v677, 0
          %vm686 = vcmp.lt.s32.totalorder %v628, 0
          %vm687 = vcmp.lt.s32.totalorder %v635, 0
          %vm688 = vcmp.lt.s32.totalorder %v642, 0
          %vm689 = vcmp.lt.s32.totalorder %v649, 0
          %vm690 = vcmp.lt.s32.totalorder %v656, 0
          %vm691 = vcmp.lt.s32.totalorder %v663, 0
          %vm692 = vcmp.lt.s32.totalorder %v670, 0
          %vm693 = vcmp.lt.s32.totalorder %v677, 0
          %vm694 = vmand %vm686, %vm678
          %vm695 = vmand %vm687, %vm679
          %vm696 = vmand %vm688, %vm680
          %vm697 = vmand %vm689, %vm681
          %vm698 = vmand %vm690, %vm682
          %vm699 = vmand %vm691, %vm683
          %vm700 = vmand %vm692, %vm684
          %vm701 = vmand %vm693, %vm685
          %v702 = vadd.s32 %v628, 16
          %v703 = vadd.s32 %v635, 16
          %v704 = vadd.s32 %v642, 16
          %v705 = vadd.s32 %v649, 16
          %v706 = vadd.s32 %v656, 16
          %v707 = vadd.s32 %v663, 16
          %v708 = vadd.s32 %v670, 16
          %v709 = vadd.s32 %v677, 16
          %v710 = vsel %vm694, %v702, %v628
          %v711 = vsel %vm695, %v703, %v635
          %v712 = vsel %vm696, %v704, %v642
          %v713 = vsel %vm697, %v705, %v649
          %v714 = vsel %vm698, %v706, %v656
          %v715 = vsel %vm699, %v707, %v663
          %v716 = vsel %vm700, %v708, %v670
          %v717 = vsel %vm701, %v709, %v677
          %vm718 = vcmp.lt.s32.totalorder %v710, 14
          %vm719 = vcmp.lt.s32.totalorder %v711, 14
          %vm720 = vcmp.lt.s32.totalorder %v712, 14
          %vm721 = vcmp.lt.s32.totalorder %v713, 14
          %vm722 = vcmp.lt.s32.totalorder %v714, 14
          %vm723 = vcmp.lt.s32.totalorder %v715, 14
          %vm724 = vcmp.lt.s32.totalorder %v716, 14
          %vm725 = vcmp.lt.s32.totalorder %v717, 14
          %vm726 = vmand %vm614, %vm718
          %vm727 = vmand %vm615, %vm719
          %vm728 = vmand %vm616, %vm720
          %vm729 = vmand %vm617, %vm721
          %vm730 = vmand %vm618, %vm722
          %vm731 = vmand %vm619, %vm723
          %vm732 = vmand %vm620, %vm724
          %vm733 = vmand %vm621, %vm725
          %v734 = vsel %vm726, 1, 0
          %v735 = vsel %vm727, 1, 0
          %v736 = vsel %vm728, 1, 0
          %v737 = vsel %vm729, 1, 0
          %v738 = vsel %vm730, 1, 0
          %v739 = vsel %vm731, 1, 0
          %v740 = vsel %vm732, 1, 0
          %v741 = vsel %vm733, 1, 0
          %vm742 = vcmp.eq.s32.totalorder %v734, 1
          %vm743 = vcmp.eq.s32.totalorder %v735, 1
          %vm744 = vcmp.eq.s32.totalorder %v736, 1
          %vm745 = vcmp.eq.s32.totalorder %v737, 1
          %vm746 = vcmp.eq.s32.totalorder %v738, 1
          %vm747 = vcmp.eq.s32.totalorder %v739, 1
          %vm748 = vcmp.eq.s32.totalorder %v740, 1
          %vm749 = vcmp.eq.s32.totalorder %v741, 1
          %v750 = vsel %vm742, %v579, 0.0
          %v751 = vsel %vm743, %v580, 0.0
          %v752 = vsel %vm744, %v581, 0.0
          %v753 = vsel %vm745, %v582, 0.0
          %v754 = vsel %vm746, %v583, 0.0
          %v755 = vsel %vm747, %v584, 0.0
          %v756 = vsel %vm748, %v585, 0.0
          %v757 = vsel %vm749, %v586, 0.0
          %v758 = vadd.f32 %v750, %v751
          %v759 = vadd.f32 %v758, %v752
          %v760 = vadd.f32 %v759, %v753
          %v761 = vadd.f32 %v760, %v754
          %v762 = vadd.f32 %v761, %v755
          %v763 = vadd.f32 %v762, %v756
          %v764 = vadd.f32 %v763, %v757
          %v765 = vrot.slane %v764, 4
          %v766 = vadd.f32 %v764, %v765
          %v767 = vrot.slane %v766, 2
          %v768 = vadd.f32 %v766, %v767
          %v769 = vrot.slane %v768, 1
          %v770 = vadd.f32 %v768, %v769
          %771 = vst [vmem:[%s223] sm:$0x1] %v770
          %v772 = vmul.f32 %v750, %v750
          %v773 = vmul.f32 %v751, %v751
          %v774 = vmul.f32 %v752, %v752
          %v775 = vmul.f32 %v753, %v753
          %v776 = vmul.f32 %v754, %v754
          %v777 = vmul.f32 %v755, %v755
          %v778 = vmul.f32 %v756, %v756
          %v779 = vmul.f32 %v757, %v757
          %v780 = vadd.f32 %v772, %v773
          %v781 = vadd.f32 %v780, %v774
          %v782 = vadd.f32 %v781, %v775
          %v783 = vadd.f32 %v782, %v776
          %v784 = vadd.f32 %v783, %v777
          %v785 = vadd.f32 %v784, %v778
          %v786 = vadd.f32 %v785, %v779
          %v787 = vrot.slane %v786, 4
          %v788 = vadd.f32 %v786, %v787
          %v789 = vrot.slane %v788, 2
          %v790 = vadd.f32 %v788, %v789
          %v791 = vrot.slane %v790, 1
          %v792 = vadd.f32 %v790, %v791
          %793 = vst [vmem:[%s223 + $0x1] sm:$0x1] %v792
        $region40: #{tpu_custom_call.1} parent=31 // pred_fallthru
          _
        %s794 = sand.u32 %s112, 1
        %s795 = scalar_lea.sflag [#allocation4], %s794
        %s796 = sand.u32 %s112, 1
        %s797 = smul.addr %s796, 64
        %s798 = scalar_lea.vmem [#allocation3], %s797
        %s799 = sand.u32 %s138, 1
        %s800 = scalar_lea.sflag [#allocation6], %s799
        %s801 = sand.u32 %s138, 1
        %s802 = smul.addr %s801, 2
        %s803 = scalar_lea.vmem [#allocation5], %s802
        // Predicated region
        $region41: #{tpu_custom_call.1} parent=31 // pred_check
          %p804 = pneg %p122
        $region42: #{tpu_custom_call.1} parent=31 // pred_check_branch
          %806 = sbr.rel (%p804) target = $region44
        $region43: #{tpu_custom_call.1} parent=31 // pred_region
          %s807 = smul.u32 8, %s26
          %809 = vsyncadd %s795, 0
          %s810 = smul.addr %s807, 8
          %s811 = scalar_lea.hbm %s3, %s810
          %s812 = sshll.u32 %s798, 4
          %s813 = int_to_ptr.vmem [resolvable:$true] %s812
          %s814 = sshll.u32 %s811, 4
          %s815 = int_to_ptr.hbm [resolvable:$true] %s814
          %820 = dma.vmem_to_hbm [thread:$0]  %s813, 1024, %s815, %s795, 128, 128, 8
        $region44: #{tpu_custom_call.1} parent=31 // pred_fallthru
          _
        // Predicated region
        $region45: #{tpu_custom_call.1} parent=31 // pred_check
          %p821 = pneg %p148
        $region46: #{tpu_custom_call.1} parent=31 // pred_check_branch
          %823 = sbr.rel (%p821) target = $region48
        $region47: #{tpu_custom_call.1} parent=31 // pred_region
          %825 = vsyncadd %s800, 0
          %s826 = smul.addr %s26, 2
          %s827 = scalar_lea.hbm %s4, %s826
          %s829 = sshll.u32 %s803, 4
          %s830 = int_to_ptr.vmem [resolvable:$true] %s829
          %s831 = sshll.u32 %s827, 4
          %s832 = int_to_ptr.hbm [resolvable:$true] %s831
          %834 = dma.vmem_to_hbm [thread:$0]  %s830, 32, %s832, %s800
        $region48: #{tpu_custom_call.1} parent=31 // pred_fallthru
          _
      $region32: #{tpu_custom_call.1} parent=5 // pred_fallthru
        _
      %p835 = scmp.le.s32.totalorder 2, %s17
      // Predicated region
      $region49: #{tpu_custom_call.1} parent=5 // pred_check
        %p836 = pneg %p835
      $region50: #{tpu_custom_call.1} parent=5 // pred_check_branch
        %838 = sbr.rel (%p836) target = $region52
      $region51: #{tpu_custom_call.1} parent=5 // pred_region
        %s839 = ssub.s32 %s17, 2
        // Predicated region
        $region53: #{tpu_custom_call.1} parent=51 // pred_check
          %p840 = pneg %p128
        $region54: #{tpu_custom_call.1} parent=51 // pred_check_branch
          %842 = sbr.rel (%p840) target = $region56
        $region55: #{tpu_custom_call.1} parent=51 // pred_region
          %s843 = sand.u32 %s113, 1
          %s844 = scalar_lea.sflag [#allocation4], %s843
          %s845 = sand.u32 %s113, 1
          %s846 = smul.addr %s845, 64
          %s847 = scalar_lea.vmem [#allocation3], %s846
          %849 = dma.done %s844, 1024
        $region56: #{tpu_custom_call.1} parent=51 // pred_fallthru
          _
        // Predicated region
        $region57: #{tpu_custom_call.1} parent=51 // pred_check
          %p850 = pneg %p154
        $region58: #{tpu_custom_call.1} parent=51 // pred_check_branch
          %852 = sbr.rel (%p850) target = $region60
        $region59: #{tpu_custom_call.1} parent=51 // pred_region
          %s853 = sand.u32 %s139, 1
          %s854 = scalar_lea.sflag [#allocation6], %s853
          %s855 = sand.u32 %s139, 1
          %s856 = smul.addr %s855, 2
          %s857 = scalar_lea.vmem [#allocation5], %s856
          %859 = dma.done %s854, 32
        $region60: #{tpu_custom_call.1} parent=51 // pred_fallthru
          _
      $region52: #{tpu_custom_call.1} parent=5 // pred_fallthru
        _
    $region6: #{tpu_custom_call.1} parent=1 // loop_footer
      %s21 = sadd.s32 1, %s17
    $region7: #{tpu_custom_call.1} parent=1 // loop_footer_branch
      %16 = sbr.rel target = $region3
    $region8: #{tpu_custom_call.1} parent=1 // loop_exit
      _
    %860 = vsyncpa [#allocation4], 1
    %s861 = scalar_lea.sflag [#allocation4], 1
    %862 = vsyncpa %s861, 1
    %863 = vsyncpa [#allocation6], 1
    %s864 = scalar_lea.sflag [#allocation6], 1
    %865 = vsyncpa %s864, 1

</llo_original>
